<compile_context>
chip_gen: v7x
topology: tpu7x:2x2x1
jax: 0.10.0
libtpu: 0.0.40
codegen_flags: <defaults>
</compile_context>

<pallas_src>
import math

import jax
import jax.numpy as jnp
from jax.experimental import pallas as pl
from jax.experimental.pallas import tpu as pltpu

_LANES = 128


def _drop_path_kernel(x_ref, s_ref, o_ref):
    """x_ref/o_ref: (TR, 128) data tiles; s_ref: (TR, 1) f32 per-row scale."""
    o_ref[...] = (x_ref[...].astype(jnp.float32) * s_ref[...]).astype(o_ref.dtype)


def drop_path_pallas(x, key, drop_prob: float = 0.0, training: bool = False):
    """Pallas implementation of drop_path(x, drop_prob, training)."""
    if drop_prob == 0.0 or not training:
        return x

    keep_prob = 1.0 - drop_prob
    B = x.shape[0]
    F = int(math.prod(x.shape[1:]))
    if B == 0 or F == 0:
        return x

    # Per-sample keep decision, same construction as the torch reference:
    # floor(keep_prob + U[0,1)) -> 1 with probability keep_prob, else 0.
    u = jax.random.uniform(key, (B,), dtype=jnp.float32)
    scale = jnp.floor(keep_prob + u) * jnp.float32(1.0 / keep_prob)  # (B,) f32

    # Lane-dense (rows, 128) slab spanning all samples. If the per-sample size
    # is not a multiple of 128, pad it up (sliced back below) so every store is
    # a full unmasked 128-lane vst.
    Fp = ((F + _LANES - 1) // _LANES) * _LANES
    R = Fp // _LANES
    xf = x.reshape(B, F)
    if Fp != F:
        xf = jnp.pad(xf, ((0, 0), (0, Fp - F)))
    x2 = xf.reshape(B * R, _LANES)

    # Per-row scale column (0 or 1/keep_prob), broadcast over lanes in-kernel.
    scale_rows = jnp.broadcast_to(scale[:, None, None], (B, R, 1)).reshape(B * R, 1)

    total_rows = B * R
    itemsize = jnp.dtype(x.dtype).itemsize

    # ~4 MiB data blocks: big enough that the ~0.35 us per-grid-step overhead
    # is <10% even on v7x-class HBM, small enough that the double-buffered
    # in+out footprint (~16 MiB) fits the 32 MiB scoped VMEM limit set below.
    block_bytes = 4 * 1024 * 1024
    tr = max(8, (block_bytes // (_LANES * itemsize)) // 8 * 8)  # multiple of 8
    tr = min(tr, total_rows)  # block dims == full dims is always legal
    grid = (pl.cdiv(total_rows, tr),)

    out = pl.pallas_call(
        _drop_path_kernel,
        out_shape=jax.ShapeDtypeStruct((total_rows, _LANES), x.dtype),
        grid=grid,
        in_specs=[
            pl.BlockSpec((tr, _LANES), lambda t: (t, 0)),
            pl.BlockSpec((tr, 1), lambda t: (t, 0)),
        ],
        out_specs=pl.BlockSpec((tr, _LANES), lambda t: (t, 0)),
        compiler_params=pltpu.CompilerParams(
            dimension_semantics=("parallel",),
            vmem_limit_bytes=32 * 1024 * 1024,
        ),
    )(x2, scale_rows)

    out = out.reshape(B, Fp)
    if Fp != F:
        out = out[:, :F]
    return out.reshape(x.shape)


class DropPath:
    """Mirror of the PyTorch DropPath module (stateless; no parameters)."""

    def __init__(self, drop_prob=None):
        self.drop_prob = 0.0 if drop_prob is None else float(drop_prob)
        self.training = True

    def __call__(self, x, key):
        return drop_path_pallas(x, key, self.drop_prob, self.training)


if __name__ == "__main__":
    key = jax.random.PRNGKey(0)
    kx, kd = jax.random.split(key)

    B, N, C = 2, 8, 32  # standard ViT token layout (batch, tokens, channels)
    x = jax.random.normal(kx, (B, N, C), dtype=jnp.float32)

    drop_prob = 0.25
    keep_prob = 1.0 - drop_prob

    # Training path (stochastic, lane-dense multi-sample blocking).
    mod = DropPath(drop_prob)
    mod.training = True
    y = jax.block_until_ready(mod(x, kd))

    ok = True
    for b in range(B):
        zeroed = bool(jnp.all(y[b] == 0.0))
        scaled = bool(jnp.allclose(y[b], x[b] / keep_prob, atol=1e-5, rtol=1e-5))
        ok = ok and (zeroed or scaled)

    # Padding path (per-sample size not a multiple of 128).
    x2 = jax.random.normal(kx, (2, 5, 24), dtype=jnp.float32)
    y2 = jax.block_until_ready(drop_path_pallas(x2, kd, drop_prob, True))
    for b in range(2):
        zeroed = bool(jnp.all(y2[b] == 0.0))
        scaled = bool(jnp.allclose(y2[b], x2[b] / keep_prob, atol=1e-5, rtol=1e-5))
        ok = ok and (zeroed or scaled)

    # bf16 path (f32 multiply, cast product).
    x3 = jax.random.normal(kx, (4, 16, 128), dtype=jnp.bfloat16)
    y3 = jax.block_until_ready(drop_path_pallas(x3, kd, drop_prob, True))
    for b in range(4):
        zeroed = bool(jnp.all(y3[b] == 0))
        scaled = bool(
            jnp.allclose(
                y3[b].astype(jnp.float32),
                x3[b].astype(jnp.float32) / keep_prob,
                atol=2e-2,
                rtol=2e-2,
            )
        )
        ok = ok and (zeroed or scaled)

    # Eval path (identity, no kernel launch).
    mod.training = False
    y_eval = jax.block_until_ready(mod(x, kd))
    ok = ok and bool(jnp.allclose(y_eval, x))

    assert ok, "DropPath semantics check failed"
    print("KERNEL_OK")
</pallas_src>

<mosaic_0001>
module attributes {stable_mosaic.version = 11 : i64} {
  func.func @_drop_path_kernel(%arg0: i32, %arg1: memref<4x128xf32, #tpu.memory_space<vmem>>, %arg2: memref<4x1xf32, #tpu.memory_space<vmem>>, %arg3: memref<4x128xf32, #tpu.memory_space<vmem>>) attributes {dimension_semantics = [#tpu.dimension_semantics<parallel>], iteration_bounds = array<i64: 1>, scalar_prefetch = 0 : i64, scratch_operands = 0 : i64, tpu.core_type = #tpu.core_type<tc>, window_params = [{transform_indices = @transform_0, window_bounds = array<i64: 4, 128>}, {transform_indices = @transform_1, window_bounds = array<i64: 4, 1>}, {transform_indices = @transform_2, window_bounds = array<i64: 4, 128>}]} {
    %c0 = arith.constant 0 : index
    %c0_0 = arith.constant 0 : index
    %0 = vector.load %arg1[%c0, %c0_0] : memref<4x128xf32, #tpu.memory_space<vmem>>, vector<4x128xf32>
    %c0_1 = arith.constant 0 : index
    %c0_2 = arith.constant 0 : index
    %1 = vector.load %arg2[%c0_1, %c0_2] : memref<4x1xf32, #tpu.memory_space<vmem>>, vector<4x1xf32>
    %2 = vector.broadcast %1 : vector<4x1xf32> to vector<4x128xf32>
    %3 = arith.mulf %0, %2 : vector<4x128xf32>
    %c0_3 = arith.constant 0 : index
    %c0_4 = arith.constant 0 : index
    %4 = vector.load %arg3[%c0_3, %c0_4] : memref<4x128xf32, #tpu.memory_space<vmem>>, vector<4x128xf32>
    tpu.vector_store %arg3[%c0_3, %c0_4], %3 {strides = array<i32>} : memref<4x128xf32, #tpu.memory_space<vmem>>, vector<4x128xf32>,
    return
  }
  func.func @transform_0(%arg0: i32) -> (i32, i32) {
    %c0_i32 = arith.constant 0 : i32
    %c0_i32_0 = arith.constant 0 : i32
    return %arg0, %c0_i32 : i32, i32
  }
  func.func @transform_1(%arg0: i32) -> (i32, i32) {
    %c0_i32 = arith.constant 0 : i32
    %c0_i32_0 = arith.constant 0 : i32
    return %arg0, %c0_i32 : i32, i32
  }
  func.func @transform_2(%arg0: i32) -> (i32, i32) {
    %c0_i32 = arith.constant 0 : i32
    %c0_i32_0 = arith.constant 0 : i32
    return %arg0, %c0_i32 : i32, i32
  }
}

</mosaic_0001>

<llo_original>
// kernel: tpu_custom_call.1
$region0: #{tpu_custom_call.1}
  #allocation0 [shape = 'u32[]', space=smem, size = 0x4, offset = 0x4, fixed_abs, tag = 'smem constant byte address 0x4 - core index']
  #allocation1 [shape = 'u32[144,128]{1,0:T(1,128)}', space=vmem, size = 0x12000, scoped, tag = 'internal scratch']
  %s0 = inlined_call_operand.vmem [shape: f32[4,128], index: 0, kind: input, shape index: {}]
  %s1 = inlined_call_operand.vmem [shape: f32[4,1], index: 1, kind: input, shape index: {}]
  %s2 = inlined_call_operand.hbm [shape: f32[4,128], index: 2, kind: output, shape index: {}]
  %s3 = sld [smem:[#allocation0]]
  $region18: #{tpu_custom_call.1} parent=0
    _
  %s5 = ssub.s32 1, %s3
  %s6 = scalar_select 0, %s5, %s3
  $region1: #{tpu_custom_call.1} parent=0
    #allocation2 [shape = 'u8[2048]{0}', space=vmem, size = 0x800, scoped, tag = 'output window, operand 0, single buffered']
    #allocation3 [shape = 's32[1]{0}', space=sflag, size = 0x4, scoped, tag = 'scoped memory for tpu_custom_call.1']
    %7 = vsyncpa [#allocation3], 0
    // Predicated region
    $region2: #{tpu_custom_call.1} parent=1 // pred_check
      _
    $region3: #{tpu_custom_call.1} parent=1 // pred_check_branch
      %9 = sbr.rel (0) target = $region5
    $region4: #{tpu_custom_call.1} parent=1 // pred_region
      _
    $region5: #{tpu_custom_call.1} parent=1 // pred_fallthru
      _
    // Predicated region
    $region6: #{tpu_custom_call.1} parent=1 // pred_check
      _
    $region7: #{tpu_custom_call.1} parent=1 // pred_check_branch
      %11 = sbr.rel (0) target = $region9
    $region8: #{tpu_custom_call.1} parent=1 // pred_region
      _
    $region9: #{tpu_custom_call.1} parent=1 // pred_fallthru
      _
    %v12 = vld [vmem:[%s0] sm:$0xf]
    %v13 = vld [vmem:[%s1] sm:$0xf]
    %15 = vset.pattern.permute.xlu0 0
    %16 = vperm.xlu0 %15, %v13
    %v17 = vpop.permute.xlu0 %16
    %v19 = vmul.f32 %v12, %v17
    %20 = vst [vmem:[#allocation2] sm:$0xf] %v19
    // Predicated region
    $region10: #{tpu_custom_call.1} parent=1 // pred_check
      _
    $region11: #{tpu_custom_call.1} parent=1 // pred_check_branch
      %22 = sbr.rel (0) target = $region13
    $region12: #{tpu_custom_call.1} parent=1 // pred_region
      %s24 = ssub.s32 64, 64
      %25 = vsyncadd [#allocation3], %s24
      %s27 = sshll.u32 [#allocation2], 4
      %s28 = int_to_ptr.vmem [resolvable:$true] %s27
      %30 = dma.vmem_to_hbm [thread:$0]  %s28, 64, %s2, [#allocation3]
    $region13: #{tpu_custom_call.1} parent=1 // pred_fallthru
      _
    // Predicated region
    $region14: #{tpu_custom_call.1} parent=1 // pred_check
      _
    $region15: #{tpu_custom_call.1} parent=1 // pred_check_branch
      %32 = sbr.rel (0) target = $region17
    $region16: #{tpu_custom_call.1} parent=1 // pred_region
      %33 = dma.done [#allocation3], 64
    $region17: #{tpu_custom_call.1} parent=1 // pred_fallthru
      _
    %34 = vsyncpa [#allocation3], 1

</llo_original>
